<compile_context>
chip_gen: v6e
topology: v6e:2x2x1
jax: 0.10.0
libtpu: 0.0.40
codegen_flags: <defaults>
</compile_context>

<pallas_src>
import jax
import jax.numpy as jnp
from jax.experimental import pallas as pl
from jax.experimental.pallas import tpu as pltpu


_VMEM_BUDGET = 48 * 2 ** 20   # stay well under v7x's 64 MiB physical VMEM


def _round_up(x, m):
    return (x + m - 1) // m * m


def _wt_pt_bias_relu_kernel(pt_ref, wt_ref, b_ref, o_ref):
    """One lane-block of the transposed im2col matmul per grid step.

    pt_ref: (K, TM)   bf16  column-block of patches^T (M on lanes)
    wt_ref: (Cout, K) bf16  flattened conv weights (resident across the grid)
    b_ref:  (Cout, 1) f32   bias
    o_ref:  (Cout, TM) f32  output^T block (lane-dense, unpadded store)
    """
    acc = jnp.dot(wt_ref[...], pt_ref[...], preferred_element_type=jnp.float32)
    o_ref[...] = jnp.maximum(acc + b_ref[...], 0.0).astype(o_ref.dtype)


def conv3x3_relu_pallas(x_nchw, w_oihw, bias, *, block_cols=None):
    """Equivalent of relu(nn.Conv2d(Cin, Cout, 3, padding=1)(x)) in NCHW."""
    N, Cin, H, W = x_nchw.shape
    Cout = w_oihw.shape[0]
    K = 9 * Cin                     # im2col contraction size (NOT padded in HBM)
    M = N * H * W                   # im2col columns (lane axis)

    # --- tile-size selection --------------------------------------------------
    if block_cols is None:
        # bytes per output column, double-buffered input + output blocks
        per_col = 2 * (K * 2 + Cout * 4)
        tm_cap = max(128, (_VMEM_BUDGET // per_col) // 128 * 128)
        target = min(2048, tm_cap)              # big tiles -> ~85%+ of HBM roofline
        steps = pl.cdiv(M, target)
        if M > 128:
            steps = max(2, steps)               # give both v7x TensorCores work
            steps += steps % 2                  # even step count for the 2-TC split
        block_cols = _round_up(pl.cdiv(M, steps), 128)
    else:
        steps = pl.cdiv(M, block_cols)
    steps = max(1, (block_cols and pl.cdiv(max(M, 1), block_cols)))
    MP = _round_up(M, block_cols)
    steps = MP // block_cols

    # --- wrapper glue (plain JAX, fused under jit): halo pad + transposed im2col
    x_bf = x_nchw.astype(jnp.bfloat16)
    x_pad = jnp.pad(x_bf, ((0, 0), (0, 0), (1, 1), (1, 1)))          # (N,Cin,H+2,W+2)
    taps = [x_pad[:, :, dy:dy + H, dx:dx + W]
            for dy in range(3) for dx in range(3)]                    # 9 x (N,Cin,H,W)
    # P^T[(tap*Cin + c), (n*H*W + h*W + w)] = x_pad[n, c, h+dy, w+dx]
    pt = jnp.stack(taps, axis=0).transpose(0, 2, 1, 3, 4).reshape(K, M)
    if MP > M:
        pt = jnp.pad(pt, ((0, 0), (0, MP - M)))

    # (Cout,Cin,3,3) -> (Cout, ky, kx, Cin) -> (Cout, 9*Cin); K-order matches P^T.
    wt = jnp.transpose(w_oihw, (0, 2, 3, 1)).reshape(Cout, K).astype(jnp.bfloat16)
    b2 = bias.astype(jnp.float32).reshape(Cout, 1)

    # explicit VMEM budget (double-buffered blocks + resident weight/bias slabs)
    est_vmem = 2 * (K * block_cols * 2 + Cout * block_cols * 4) + Cout * K * 2 + Cout * 4
    vmem_limit = int(min(56 * 2 ** 20, max(2 * est_vmem, 32 * 2 ** 20)))

    out_t = pl.pallas_call(
        _wt_pt_bias_relu_kernel,
        out_shape=jax.ShapeDtypeStruct((Cout, MP), x_nchw.dtype),
        grid=(steps,),
        in_specs=[
            pl.BlockSpec((K, block_cols), lambda i: (0, i)),     # patches^T block
            pl.BlockSpec((Cout, K), lambda i: (0, 0)),           # resident weight slab
            pl.BlockSpec((Cout, 1), lambda i: (0, 0)),           # resident bias
        ],
        out_specs=pl.BlockSpec((Cout, block_cols), lambda i: (0, i)),
        compiler_params=pltpu.CompilerParams(
            dimension_semantics=("parallel",),
            vmem_limit_bytes=vmem_limit),
    )(pt, wt, b2)

    out = out_t[:, :M].reshape(Cout, N, H, W)     # drop M padding (if any)
    return jnp.transpose(out, (1, 0, 2, 3))       # (Cout,N,H,W) -> NCHW


def _reference(x_nchw, w_oihw, bias):
    """Pure-JAX f32 reference matching PyTorch nn.Conv2d(..., padding=1) + ReLU."""
    y = jax.lax.conv_general_dilated(
        x_nchw, w_oihw,
        window_strides=(1, 1), padding=((1, 1), (1, 1)),
        dimension_numbers=("NCHW", "OIHW", "NCHW"))
    y = y + bias.reshape(1, -1, 1, 1)
    return jnp.maximum(y, 0.0)


if __name__ == "__main__":
    # Small shapes consistent with a conv-style Model: N=2, Cin=4, H=W=16, Cout=8.
    N, Cin, H, W, Cout = 2, 4, 16, 16, 8

    key = jax.random.PRNGKey(0)
    kx, kw, kb = jax.random.split(key, 3)
    x = jax.random.normal(kx, (N, Cin, H, W), dtype=jnp.float32)
    w = jax.random.normal(kw, (Cout, Cin, 3, 3), dtype=jnp.float32) * 0.1
    b = jax.random.normal(kb, (Cout,), dtype=jnp.float32) * 0.1

    fwd = jax.jit(conv3x3_relu_pallas)            # fuse the wrapper-side im2col chain
    out = jax.block_until_ready(fwd(x, w, b))
    ref = _reference(x, w, b)

    assert out.shape == (N, Cout, H, W), out.shape
    # bf16 MXU inputs with f32 accumulation -> relaxed tolerance vs f32 reference.
    max_err = float(jnp.max(jnp.abs(out - ref)))
    assert jnp.allclose(out, ref, atol=3e-2, rtol=3e-2), f"mismatch, max_err={max_err}"

    print("KERNEL_OK")
</pallas_src>

<mosaic_0001>
module attributes {stable_mosaic.version = 11 : i64} {
  func.func @_wt_pt_bias_relu_kernel(%arg0: i32, %arg1: memref<36x256xbf16, #tpu.memory_space<vmem>>, %arg2: memref<8x36xbf16, #tpu.memory_space<vmem>>, %arg3: memref<8x1xf32, #tpu.memory_space<vmem>>, %arg4: memref<8x256xf32, #tpu.memory_space<vmem>>) attributes {dimension_semantics = [#tpu.dimension_semantics<parallel>], iteration_bounds = array<i64: 2>, scalar_prefetch = 0 : i64, scratch_operands = 0 : i64, tpu.core_type = #tpu.core_type<tc>, window_params = [{transform_indices = @transform_0, window_bounds = array<i64: 36, 256>}, {pipeline_mode = #tpu.pipeline_mode<synchronous>, transform_indices = @transform_1, window_bounds = array<i64: 8, 36>}, {pipeline_mode = #tpu.pipeline_mode<synchronous>, transform_indices = @transform_2, window_bounds = array<i64: 8, 1>}, {transform_indices = @transform_3, window_bounds = array<i64: 8, 256>}]} {
    %c0 = arith.constant 0 : index
    %c0_0 = arith.constant 0 : index
    %0 = vector.load %arg2[%c0, %c0_0] : memref<8x36xbf16, #tpu.memory_space<vmem>>, vector<8x36xbf16>
    %c0_1 = arith.constant 0 : index
    %c0_2 = arith.constant 0 : index
    %1 = vector.load %arg1[%c0_1, %c0_2] : memref<36x256xbf16, #tpu.memory_space<vmem>>, vector<36x256xbf16>
    %cst = arith.constant dense<0.000000e+00> : vector<8x256xf32>
    %2 = tpu.matmul %0, %1, %cst {dimension_numbers = #tpu.dot_dimension_numbers<[1], [0], [0], [1], [0, 0, 1, 1], [], []>} : vector<8x36xbf16>, vector<36x256xbf16>, vector<8x256xf32> -> vector<8x256xf32>
    %c0_3 = arith.constant 0 : index
    %c0_4 = arith.constant 0 : index
    %3 = vector.load %arg3[%c0_3, %c0_4] : memref<8x1xf32, #tpu.memory_space<vmem>>, vector<8x1xf32>
    %4 = vector.broadcast %3 : vector<8x1xf32> to vector<8x256xf32>
    %5 = arith.addf %2, %4 : vector<8x256xf32>
    %cst_5 = arith.constant 0.000000e+00 : f32
    %6 = vector.broadcast %cst_5 : f32 to vector<8x256xf32>
    %7 = arith.maximumf %5, %6 : vector<8x256xf32>
    %c0_6 = arith.constant 0 : index
    %c0_7 = arith.constant 0 : index
    %8 = vector.load %arg4[%c0_6, %c0_7] : memref<8x256xf32, #tpu.memory_space<vmem>>, vector<8x256xf32>
    tpu.vector_store %arg4[%c0_6, %c0_7], %7 {strides = array<i32>} : memref<8x256xf32, #tpu.memory_space<vmem>>, vector<8x256xf32>,
    return
  }
  func.func @transform_0(%arg0: i32) -> (i32, i32) {
    %c0_i32 = arith.constant 0 : i32
    %c0_i32_0 = arith.constant 0 : i32
    return %c0_i32, %arg0 : i32, i32
  }
  func.func @transform_1(%arg0: i32) -> (i32, i32) {
    %c0_i32 = arith.constant 0 : i32
    %c0_i32_0 = arith.constant 0 : i32
    %c0_i32_1 = arith.constant 0 : i32
    return %c0_i32, %c0_i32_0 : i32, i32
  }
  func.func @transform_2(%arg0: i32) -> (i32, i32) {
    %c0_i32 = arith.constant 0 : i32
    %c0_i32_0 = arith.constant 0 : i32
    %c0_i32_1 = arith.constant 0 : i32
    return %c0_i32, %c0_i32_0 : i32, i32
  }
  func.func @transform_3(%arg0: i32) -> (i32, i32) {
    %c0_i32 = arith.constant 0 : i32
    %c0_i32_0 = arith.constant 0 : i32
    return %c0_i32, %arg0 : i32, i32
  }
}

</mosaic_0001>

<llo_original>
// kernel: conv3x3_relu_pallas.1
$region0: #{conv3x3_relu_pallas.1}
  #allocation0 [shape = 'u32[]', space=smem, size = 0x4, offset = 0x4, fixed_abs, tag = 'smem constant byte address 0x4 - core index']
  #allocation1 [shape = 'u32[144,128]{1,0:T(1,128)}', space=vmem, size = 0x12000, scoped, tag = 'internal scratch']
  %s0 = inlined_call_operand.vmem [shape: bf16[36,512], index: 0, kind: input, shape index: {}]
  %s1 = inlined_call_operand.vmem [shape: bf16[8,36], index: 1, kind: input, shape index: {}]
  %s2 = inlined_call_operand.vmem [shape: f32[8,1], index: 2, kind: input, shape index: {}]
  %s3 = inlined_call_operand.vmem [shape: f32[8,512], index: 3, kind: output, shape index: {}]
  %s4 = sld [smem:[#allocation0]]
  $region83: #{conv3x3_relu_pallas.1} parent=0
    _
  %s6 = ssub.s32 1, %s4
  %s7 = scalar_select 0, %s6, %s4
  $region1: #{conv3x3_relu_pallas.1} parent=0
    #allocation2 [shape = 'u8[40960]{0}', space=vmem, size = 0xa000, scoped, tag = 'input window, operand 0']
    loop: start=0, step=1, limit=4
    $region2: #{conv3x3_relu_pallas.1} parent=1 // loop_pre_header
      _
    $region3: #{conv3x3_relu_pallas.1} parent=1 // loop_header
      %s9 = sphi 0, %s13
      %p10 = scmp.ge.s32.totalorder %s9, 4
      %s19 = sphi 0, %s21
      %s22 = sphi 0, %s19
      %s23 = sphi 0, %s22
      %s39 = sphi 0, %s23
      %s43 = sphi 0, %s43
      %s45 = sphi 0, %s43
      %s46 = sphi 0, %s45
      %s60 = sphi 0, %s46
      %s64 = sphi 0, %s64
      %s66 = sphi 0, %s64
      %s67 = sphi 0, %s66
      %s81 = sphi 0, %s67
      %s87 = sphi 0, %s89
      %s90 = sphi 0, %s87
      %s91 = sphi 0, %s90
      %s107 = sphi 0, %s91
    $region4: #{conv3x3_relu_pallas.1} parent=1 // loop_header_branch
      %12 = sbr.rel (%p10) target = $region8
    $region5: #{conv3x3_relu_pallas.1} parent=1 // loop_body
      %s14 = ssub.s32 %s9, 1
      %s15 = ssub.s32 %s9, 2
      %s16 = sadd.s32 %s9, 1
      %s17 = ssub.s32 %s9, %s16
      %p18 = scmp.eq.s32.totalorder %s17, 0
      %s20 = sadd.s32 %s19, 1
      %s21 = scalar_select %p18, %s19, %s20
      %p24 = pneg %p18
      %p25 = scmp.eq.s32.totalorder %s9, 1
      %p26 = por %p24, %p25
      %p27 = scmp.ne.s32.totalorder %s19, %s22
      %p28 = scmp.eq.s32.totalorder %s9, 0
      %p29 = por %p27, %p28
      %p30 = scmp.ne.s32.totalorder %s19, %s22
      %p31 = scmp.eq.s32.totalorder %s14, 1
      %p32 = por %p30, %p31
      %p33 = scmp.ne.s32.totalorder %s22, %s23
      %p34 = scmp.eq.s32.totalorder %s14, 0
      %p35 = por %p33, %p34
      %p36 = scmp.ne.s32.totalorder %s22, %s23
      %p37 = scmp.eq.s32.totalorder %s15, 1
      %p38 = por %p36, %p37
      %p40 = scmp.ne.s32.totalorder %s23, %s39
      %p41 = scmp.eq.s32.totalorder %s15, 0
      %p42 = por %p40, %p41
      %s44 = sadd.s32 %s43, 1
      %p47 = scmp.eq.s32.totalorder %s9, 1
      %p48 = scmp.ne.s32.totalorder %s43, %s45
      %p49 = scmp.eq.s32.totalorder %s9, 0
      %p50 = por %p48, %p49
      %p51 = scmp.ne.s32.totalorder %s43, %s45
      %p52 = scmp.eq.s32.totalorder %s14, 1
      %p53 = por %p51, %p52
      %p54 = scmp.ne.s32.totalorder %s45, %s46
      %p55 = scmp.eq.s32.totalorder %s14, 0
      %p56 = por %p54, %p55
      %p57 = scmp.ne.s32.totalorder %s45, %s46
      %p58 = scmp.eq.s32.totalorder %s15, 1
      %p59 = por %p57, %p58
      %p61 = scmp.ne.s32.totalorder %s46, %s60
      %p62 = scmp.eq.s32.totalorder %s15, 0
      %p63 = por %p61, %p62
      %s65 = sadd.s32 %s64, 1
      %p68 = scmp.eq.s32.totalorder %s9, 1
      %p69 = scmp.ne.s32.totalorder %s64, %s66
      %p70 = scmp.eq.s32.totalorder %s9, 0
      %p71 = por %p69, %p70
      %p72 = scmp.ne.s32.totalorder %s64, %s66
      %p73 = scmp.eq.s32.totalorder %s14, 1
      %p74 = por %p72, %p73
      %p75 = scmp.ne.s32.totalorder %s66, %s67
      %p76 = scmp.eq.s32.totalorder %s14, 0
      %p77 = por %p75, %p76
      %p78 = scmp.ne.s32.totalorder %s66, %s67
      %p79 = scmp.eq.s32.totalorder %s15, 1
      %p80 = por %p78, %p79
      %p82 = scmp.ne.s32.totalorder %s67, %s81
      %p83 = scmp.eq.s32.totalorder %s15, 0
      %p84 = por %p82, %p83
      %s85 = ssub.s32 %s9, %s16
      %p86 = scmp.eq.s32.totalorder %s85, 0
      %s88 = sadd.s32 %s87, 1
      %s89 = scalar_select %p86, %s87, %s88
      %p92 = pneg %p86
      %p93 = scmp.eq.s32.totalorder %s9, 1
      %p94 = por %p92, %p93
      %p95 = scmp.ne.s32.totalorder %s87, %s90
      %p96 = scmp.eq.s32.totalorder %s9, 0
      %p97 = por %p95, %p96
      %p98 = scmp.ne.s32.totalorder %s87, %s90
      %p99 = scmp.eq.s32.totalorder %s14, 1
      %p100 = por %p98, %p99
      %p101 = scmp.ne.s32.totalorder %s90, %s91
      %p102 = scmp.eq.s32.totalorder %s14, 0
      %p103 = por %p101, %p102
      %p104 = scmp.ne.s32.totalorder %s90, %s91
      %p105 = scmp.eq.s32.totalorder %s15, 1
      %p106 = por %p104, %p105
      %p108 = scmp.ne.s32.totalorder %s91, %s107
      %p109 = scmp.eq.s32.totalorder %s15, 0
      %p110 = por %p108, %p109
      %p111 = scmp.le.s32.totalorder 1, %s9
      %p112 = scmp.lt.s32.totalorder %s9, 3
      %p113 = pnand %p111, %p112
      %p114 = pneg %p113
      // Predicated region
      $region9: #{conv3x3_relu_pallas.1} parent=5 // pred_check
        _
      $region10: #{conv3x3_relu_pallas.1} parent=5 // pred_check_branch
        %116 = sbr.rel (%p113) target = $region12
      $region11: #{conv3x3_relu_pallas.1} parent=5 // pred_region
        %s117 = ssub.s32 %s9, 1
        // Predicated region
        $region13: #{conv3x3_relu_pallas.1} parent=11 // pred_check
          %p118 = pneg %p56
        $region14: #{conv3x3_relu_pallas.1} parent=11 // pred_check_branch
          %120 = sbr.rel (%p118) target = $region16
        $region15: #{conv3x3_relu_pallas.1} parent=11 // pred_region
          _
        $region16: #{conv3x3_relu_pallas.1} parent=11 // pred_fallthru
          _
        // Predicated region
        $region17: #{conv3x3_relu_pallas.1} parent=11 // pred_check
          %p121 = pneg %p77
        $region18: #{conv3x3_relu_pallas.1} parent=11 // pred_check_branch
          %123 = sbr.rel (%p121) target = $region20
        $region19: #{conv3x3_relu_pallas.1} parent=11 // pred_region
          _
        $region20: #{conv3x3_relu_pallas.1} parent=11 // pred_fallthru
          _
      $region12: #{conv3x3_relu_pallas.1} parent=5 // pred_fallthru
        _
      %p124 = scmp.lt.s32.totalorder %s9, 2
      // Predicated region
      $region21: #{conv3x3_relu_pallas.1} parent=5 // pred_check
        %p125 = pneg %p124
      $region22: #{conv3x3_relu_pallas.1} parent=5 // pred_check_branch
        %127 = sbr.rel (%p125) target = $region24
      $region23: #{conv3x3_relu_pallas.1} parent=5 // pred_region
        // Predicated region
        $region25: #{conv3x3_relu_pallas.1} parent=23 // pred_check
          %p128 = pneg %p29
        $region26: #{conv3x3_relu_pallas.1} parent=23 // pred_check_branch
          %130 = sbr.rel (%p128) target = $region28
        $region27: #{conv3x3_relu_pallas.1} parent=23 // pred_region
          %s131 = sand.u32 %s19, 1
          %s132 = sand.u32 %s19, 1
          %s133 = smul.addr %s132, 40
          %s134 = scalar_lea.vmem [#allocation2], %s133
          %s135 = smul.u32 2, %s9
          %s136 = smul.addr %s135, 4
          %s137 = scalar_lea.vmem %s0, %s136
          // Predicated region
          $region29: #{conv3x3_relu_pallas.1} parent=27 // pred_check
            _
          $region30: #{conv3x3_relu_pallas.1} parent=27 // pred_check_branch
            %139 = sbr.rel (0) target = $region32
          $region31: #{conv3x3_relu_pallas.1} parent=27 // pred_region
            // Predicated region
            $region33: #{conv3x3_relu_pallas.1} parent=31 // pred_check
              _
            $region34: #{conv3x3_relu_pallas.1} parent=31 // pred_check_branch
              %141 = sbr.rel (0) target = $region36
            $region35: #{conv3x3_relu_pallas.1} parent=31 // pred_region
              // Predicated region
              $region48: #{conv3x3_relu_pallas.1} parent=35 // pred_check
                _
              $region49: #{conv3x3_relu_pallas.1} parent=35 // pred_check_branch
                %165 = sbr.rel (0) target = $region51
              $region50: #{conv3x3_relu_pallas.1} parent=35 // pred_region
                loop: start=0, step=1, limit=1
                $region52: #{conv3x3_relu_pallas.1} parent=50 // loop_pre_header
                  _
                $region53: #{conv3x3_relu_pallas.1} parent=50 // loop_header
                  %s167 = sphi 0, %s171
                  %p168 = scmp.ge.s32.totalorder %s167, 1
                  %s172 = sphi %s137, %s137
                  %s173 = sphi %s134, %s134
                $region54: #{conv3x3_relu_pallas.1} parent=50 // loop_header_branch
                  %170 = sbr.rel (%p168) target = $region58
                $region55: #{conv3x3_relu_pallas.1} parent=50 // loop_body
                  %v174 = vld [vmem:[%s172] sm:$0xff]
                  %175 = vst [vmem:[%s173] sm:$0xff] %v174
                  %v176 = vld [vmem:[%s172 + $0x10] sm:$0xff]
                  %177 = vst [vmem:[%s173 + $0x8] sm:$0xff] %v176
                  %v178 = vld [vmem:[%s172 + $0x20] sm:$0xff]
                  %179 = vst [vmem:[%s173 + $0x10] sm:$0xff] %v178
                  %v180 = vld [vmem:[%s172 + $0x30] sm:$0xff]
                  %181 = vst [vmem:[%s173 + $0x18] sm:$0xff] %v180
                  %v182 = vld [vmem:[%s172 + $0x40] sm:$0xff]
                  %183 = vst [vmem:[%s173 + $0x20] sm:$0xff] %v182
                $region56: #{conv3x3_relu_pallas.1} parent=50 // loop_footer
                  %s171 = sadd.s32 1, %s167
                $region57: #{conv3x3_relu_pallas.1} parent=50 // loop_footer_branch
                  %166 = sbr.rel target = $region53
                $region58: #{conv3x3_relu_pallas.1} parent=50 // loop_exit
                  _
              $region51: #{conv3x3_relu_pallas.1} parent=35 // pred_fallthru
                _
              // Predicated region
              $region59: #{conv3x3_relu_pallas.1} parent=35 // pred_check
                _
              $region60: #{conv3x3_relu_pallas.1} parent=35 // pred_check_branch
                %185 = sbr.rel target = $region62
              $region61: #{conv3x3_relu_pallas.1} parent=35 // pred_region
                _
              $region62: #{conv3x3_relu_pallas.1} parent=35 // pred_fallthru
                _
            $region36: #{conv3x3_relu_pallas.1} parent=31 // pred_fallthru
              _
            // Predicated region
            $region37: #{conv3x3_relu_pallas.1} parent=31 // pred_check
              _
            $region38: #{conv3x3_relu_pallas.1} parent=31 // pred_check_branch
              %143 = sbr.rel target = $region40
            $region39: #{conv3x3_relu_pallas.1} parent=31 // pred_region
              %s145 = ssub.s32 256, 1
              loop: start=0, step=1, limit=1
              $region41: #{conv3x3_relu_pallas.1} parent=39 // loop_pre_header
                _
              $region42: #{conv3x3_relu_pallas.1} parent=39 // loop_header
                %s147 = sphi 0, %s151
                %p148 = scmp.ge.s32.totalorder %s147, 1
                %s152 = sphi %s137, %s137
                %s153 = sphi %s134, %s134
              $region43: #{conv3x3_relu_pallas.1} parent=39 // loop_header_branch
                %150 = sbr.rel (%p148) target = $region47
              $region44: #{conv3x3_relu_pallas.1} parent=39 // loop_body
                %v154 = vld [vmem:[%s152] sm:%s145]
                %155 = vst [vmem:[%s153] sm:%s145] %v154
                %v156 = vld [vmem:[%s152 + $0x10] sm:%s145]
                %157 = vst [vmem:[%s153 + $0x8] sm:%s145] %v156
                %v158 = vld [vmem:[%s152 + $0x20] sm:%s145]
                %159 = vst [vmem:[%s153 + $0x10] sm:%s145] %v158
                %v160 = vld [vmem:[%s152 + $0x30] sm:%s145]
                %161 = vst [vmem:[%s153 + $0x18] sm:%s145] %v160
                %v162 = vld [vmem:[%s152 + $0x40] sm:%s145]
                %163 = vst [vmem:[%s153 + $0x20] sm:%s145] %v162
              $region45: #{conv3x3_relu_pallas.1} parent=39 // loop_footer
                %s151 = sadd.s32 1, %s147
              $region46: #{conv3x3_relu_pallas.1} parent=39 // loop_footer_branch
                %146 = sbr.rel target = $region42
              $region47: #{conv3x3_relu_pallas.1} parent=39 // loop_exit
                _
            $region40: #{conv3x3_relu_pallas.1} parent=31 // pred_fallthru
              _
          $region32: #{conv3x3_relu_pallas.1} parent=27 // pred_fallthru
            _
          %186 = vnop
        $region28: #{conv3x3_relu_pallas.1} parent=23 // pred_fallthru
          _
      $region24: #{conv3x3_relu_pallas.1} parent=5 // pred_fallthru
        _
      %p187 = scmp.le.s32.totalorder 1, %s9
      %p188 = scmp.lt.s32.totalorder %s9, 3
      %p189 = pnand %p187, %p188
      %p190 = pneg %p189
      // Predicated region
      $region63: #{conv3x3_relu_pallas.1} parent=5 // pred_check
        _
      $region64: #{conv3x3_relu_pallas.1} parent=5 // pred_check_branch
        %192 = sbr.rel (%p189) target = $region66
      $region65: #{conv3x3_relu_pallas.1} parent=5 // pred_region
        %s193 = ssub.s32 %s9, 1
        %s194 = sand.u32 %s22, 1
        %s195 = sand.u32 %s22, 1
        %s196 = smul.addr %s195, 40
        %s197 = scalar_lea.vmem [#allocation2], %s196
        // Predicated region
        $region67: #{conv3x3_relu_pallas.1} parent=65 // pred_check
          %p198 = pneg %p35
        $region68: #{conv3x3_relu_pallas.1} parent=65 // pred_check_branch
          %200 = sbr.rel (%p198) target = $region70
        $region69: #{conv3x3_relu_pallas.1} parent=65 // pred_region
          _
        $region70: #{conv3x3_relu_pallas.1} parent=65 // pred_fallthru
          _
        %s201 = sand.u32 %s22, 1
        %s202 = sand.u32 %s22, 1
        %s203 = smul.addr %s202, 40
        %s204 = scalar_lea.vmem [#allocation2], %s203
        %p205 = pneg %p35
        %p206 = pneg %p32
        %p207 = pneg %p56
        %p208 = pneg %p53
        %p209 = pneg %p77
        %p210 = pneg %p74
        %p211 = pneg %p103
        %p212 = pneg %p100
        %s213 = smul.u32 2, %s14
        %p214 = scmp.lt.s32.totalorder %s213, 3
        %s215 = scalar_select %p214, %s213, 3
        %s216 = smul.addr %s215, 8
        %s217 = scalar_lea.vmem %s3, %s216
        %s218 = smul.u32 2, %s14
        %s219 = smul.u32 2, %s14
        %p220 = scmp.lt.s32.totalorder %s219, 3
        %s221 = scalar_select %p220, %s219, 3
        %s222 = smul.addr %s221, 8
        %s223 = scalar_lea.vmem %s3, %s222
        %s224 = smul.u32 2, %s14
        %v226 = vld [vmem:[%s1] sm:$0xf]
        %v227 = vld [vmem:[%s197] sm:$0xff]
        %v228 = vld [vmem:[%s197 + $0x8] sm:$0xff]
        %v229 = vld [vmem:[%s197 + $0x10] sm:$0xff]
        %v230 = vld [vmem:[%s197 + $0x18] sm:$0xff]
        %v231 = vld [vmem:[%s197 + $0x20] sm:$0x33]
        %v232 = vld [vmem:[%s2] sm:$0xff]
        %234 = vset.pattern.permute.xlu0 0
        %235 = vperm.xlu0 %234, %v232
        %v236 = vpop.permute.xlu0 %235
        %v243 = vunpack.c.l.b16 %v227
        %v244 = vunpack.c.h.b16 %v227
        %v245 = vunpack.c.l.b16 %v228
        %v246 = vunpack.c.h.b16 %v228
        %v247 = vunpack.c.l.b16 %v229
        %v248 = vunpack.c.h.b16 %v229
        %v249 = vunpack.c.l.b16 %v230
        %v250 = vunpack.c.h.b16 %v230
        %v251 = vunpack.c.l.b16 %v231
        %v252 = vunpack.c.h.b16 %v231
        %v253 = vpack.c.b16 %v245, %v243
        %v254 = vpack.c.b16 %v246, %v244
        %v255 = vpack.c.b16 %v249, %v247
        %v256 = vpack.c.b16 %v250, %v248
        %v257 = vpack.c.b16 %v251, %v251
        %v258 = vpack.c.b16 %v252, %v252
        %vm263 = vcmask 293888
        %v265 = vsel %vm263, %v226, 0
        %vm267 = vcmask 1041408
        %v269 = vsel %vm267, %v257, 0
        %v272 = vsel %vm267, %v258, 0
        %274 = vmatprep.subr.bf16.mxu0 0
        %275 = vmatpush1.bf16.msra.mxu0 0
        %276 = vmatprep.subr.bf16.mxu0 0
        %277 = vmatpush1.bf16.msra.mxu0 0
        %278 = vmatprep.subr.bf16.mxu0 0
        %279 = vmatpush1.bf16.msra.mxu0 0
        %280 = vmatprep.subr.bf16.mxu0 0
        %281 = vmatpush1.bf16.msra.mxu0 0
        %282 = vmatprep.subr.bf16.mxu0 0
        %283 = vmatpush1.bf16.msra.mxu0 0
        %284 = vmatprep.subr.bf16.mxu0 %v272
        %285 = vmatpush1.bf16.msra.mxu0 %v269
        %286 = vmatprep.subr.bf16.mxu0 %v256
        %287 = vmatpush1.bf16.msra.mxu0 %v255
        %288 = vmatprep.subr.bf16.mxu0 %v254
        %289 = vmatpush1.bf16.msra.mxu0 %v253
        %290 = vmatprep.subr.bf16.mxu0 0
        %291 = vmatpush2.bf16.msra.mxu0 0
        %292 = vmatprep.subr.bf16.mxu0 0
        %293 = vmatpush2.bf16.msra.mxu0 0
        %294 = vmatprep.subr.bf16.mxu0 0
        %295 = vmatpush2.bf16.msra.mxu0 0
        %296 = vmatprep.subr.bf16.mxu0 0
        %297 = vmatpush2.bf16.msra.mxu0 0
        %298 = vmatprep.subr.bf16.mxu0 0
        %299 = vmatpush2.bf16.msra.mxu0 0
        %300 = vmatprep.subr.bf16.mxu0 0
        %301 = vmatpush2.bf16.msra.mxu0 0
        %302 = vmatprep.subr.bf16.mxu0 0
        %303 = vmatpush2.bf16.msra.mxu0 0
        %304 = vmatprep.subr.bf16.mxu0 0
        %305 = vmatpush2.bf16.msra.mxu0 0
        %306 = vmatprep.mubr.bf16.mxu0 0
        %307 = vmatmul.mubr.bf16.gmra.mxu0 %v265
        %v308 = vpop.f32.mrf.mxu0
        %v309 = vadd.f32 %v236, %v308
        %v310 = vpop.f32.mrf.mxu0
        %v311 = vadd.f32 %v236, %v310
        %v312 = vpop.f32.mrf.mxu0
        %v313 = vpop.f32.mrf.mxu0
        %314 = vdwg.mxu0
        %v315 = vmax.f32 %v309, 0.0
        %v316 = vmax.f32 %v311, 0.0
        %317 = vst [vmem:[%s223] sm:$0xff] %v315
        %318 = vst [vmem:[%s223 + $0x8] sm:$0xff] %v316
        %s319 = smul.u32 2, %s14
        %p320 = scmp.lt.s32.totalorder %s319, 3
        %s321 = scalar_select %p320, %s319, 3
        %s322 = smul.addr %s321, 8
        %s323 = scalar_lea.vmem %s3, %s322
        // Predicated region
        $region71: #{conv3x3_relu_pallas.1} parent=65 // pred_check
          %p324 = pneg %p100
        $region72: #{conv3x3_relu_pallas.1} parent=65 // pred_check_branch
          %326 = sbr.rel (%p324) target = $region74
        $region73: #{conv3x3_relu_pallas.1} parent=65 // pred_region
          %s327 = smul.u32 2, %s14
        $region74: #{conv3x3_relu_pallas.1} parent=65 // pred_fallthru
          _
      $region66: #{conv3x3_relu_pallas.1} parent=5 // pred_fallthru
        _
      %p328 = scmp.le.s32.totalorder 2, %s9
      // Predicated region
      $region75: #{conv3x3_relu_pallas.1} parent=5 // pred_check
        %p329 = pneg %p328
      $region76: #{conv3x3_relu_pallas.1} parent=5 // pred_check_branch
        %331 = sbr.rel (%p329) target = $region78
      $region77: #{conv3x3_relu_pallas.1} parent=5 // pred_region
        %s332 = ssub.s32 %s9, 2
        // Predicated region
        $region79: #{conv3x3_relu_pallas.1} parent=77 // pred_check
          %p333 = pneg %p106
        $region80: #{conv3x3_relu_pallas.1} parent=77 // pred_check_branch
          %335 = sbr.rel (%p333) target = $region82
        $region81: #{conv3x3_relu_pallas.1} parent=77 // pred_region
          %s336 = smul.u32 2, %s15
          %p337 = scmp.lt.s32.totalorder %s336, 3
          %s338 = scalar_select %p337, %s336, 3
          %s339 = smul.addr %s338, 8
          %s340 = scalar_lea.vmem %s3, %s339
        $region82: #{conv3x3_relu_pallas.1} parent=77 // pred_fallthru
          _
      $region78: #{conv3x3_relu_pallas.1} parent=5 // pred_fallthru
        _
    $region6: #{conv3x3_relu_pallas.1} parent=1 // loop_footer
      %s13 = sadd.s32 1, %s9
    $region7: #{conv3x3_relu_pallas.1} parent=1 // loop_footer_branch
      %8 = sbr.rel target = $region3
    $region8: #{conv3x3_relu_pallas.1} parent=1 // loop_exit
      _

</llo_original>
